<compile_context>
chip_gen: v7x
topology: tpu7x:2x2x1
jax: 0.10.0
libtpu: 0.0.40
codegen_flags: <defaults>
</compile_context>

<pallas_src>
import math

import jax
import jax.numpy as jnp
from jax.experimental import pallas as pl
from jax.experimental.pallas import tpu as pltpu


# ----------------------------------------------------------------------------
# Kernel
# ----------------------------------------------------------------------------
def _drop_path_kernel(scale_ref, x_ref, o_ref):
    # scale_ref: (TB, 1) float32 per-sample scale (0 or 1/keep_prob)
    # x_ref / o_ref: (TB, TF) lane-dense tile of the flattened input/output
    x = x_ref[...].astype(jnp.float32)
    o_ref[...] = (x * scale_ref[...]).astype(o_ref.dtype)


# ----------------------------------------------------------------------------
# Tiling policy
# ----------------------------------------------------------------------------
_SUBLANE_PACK = {1: 32, 2: 16, 4: 8, 8: 8}  # itemsize -> sublane packing


def _vmem_budget():
    """(per-buffer byte target, scoped vmem_limit_bytes), keyed off chip VMEM."""
    vmem_cap = None
    try:
        info = pltpu.get_tpu_info()
        vmem_cap = getattr(info, "vmem_capacity_bytes", None)
    except Exception:
        pass
    if vmem_cap is not None and vmem_cap <= 96 * 1024 * 1024:
        # v7x-class: 64 MiB VMEM, ~3.2 TB/s HBM. Bigger tiles hide the ~0.35 us
        # per-step overhead; 4 double-buffered 8 MiB buffers = 32 MiB live.
        return 8 * 1024 * 1024, 48 * 1024 * 1024
    # v5e/v6e-class (128 MiB VMEM) or unknown: 4 MiB tiles (16 MiB live) sit on
    # the measured streaming-roofline plateau and are harmless on v5e.
    return 4 * 1024 * 1024, 32 * 1024 * 1024


def _choose_tiles(batch, feat, itemsize, target_bytes):
    """Pick (tb, tf): lane-dense 128-aligned tf, dtype-aware adaptive tb."""
    pack = _SUBLANE_PACK.get(itemsize, 8)

    # Lane tile first: 128-multiple capped by the byte budget at the minimal
    # row tile.  Small / budget-fitting F uses the full extent (always legal);
    # large F gets a capped 128-aligned tile with one ragged (masked) edge.
    max_tf = max(128, (target_bytes // (pack * itemsize)) // 128 * 128)
    if feat <= 128 or feat <= max_tf:
        tf = feat if feat % 128 != 0 else min(feat, max_tf)
        tf = feat if tf == feat else tf
        tf = min(feat, max_tf) if feat % 128 == 0 else feat
    else:
        tf = max_tf

    # Row tile: full-packed sublanes when the batch allows, then grow in
    # packing multiples toward the byte budget (keeps per-step DMA large when
    # F is small).
    tb = pack if batch >= pack else batch
    while batch >= 2 * tb and 2 * tb * tf * itemsize <= target_bytes:
        tb *= 2
    return tb, tf


# ----------------------------------------------------------------------------
# Wrapper
# ----------------------------------------------------------------------------
def drop_path(x, drop_prob: float = 0.0, training: bool = False, *, key=None):
    """Exact semantics of the reference `drop_path`:
       eval / drop_prob==0 -> identity; otherwise x/keep_prob * floor(keep_prob + U[0,1))
       with one random draw per batch sample, broadcast over all remaining dims."""
    if drop_prob == 0.0 or not training:
        return x
    if key is None:
        raise ValueError(
            "drop_path with training=True and drop_prob>0 requires an explicit PRNG `key`."
        )
    keep_prob = 1.0 - drop_prob

    B = x.shape[0]
    F = math.prod(x.shape[1:]) if x.ndim > 1 else 1

    # Per-sample keep mask, drawn & floored in float32 (avoids low-precision
    # Bernoulli bias), folded with the 1/keep_prob rescale, kept in f32 —
    # the kernel multiplies in f32 and casts on store.
    u = jax.random.uniform(key, (B, 1), dtype=jnp.float32)
    scale = jnp.floor(keep_prob + u) * (1.0 / keep_prob)  # (B, 1) f32

    # Lane-dense flattened view of x.
    x2 = x.reshape(B, F)
    target_bytes, vmem_limit = _vmem_budget()
    tb, tf = _choose_tiles(B, F, x2.dtype.itemsize, target_bytes)
    grid = (pl.cdiv(B, tb), pl.cdiv(F, tf))

    out2 = pl.pallas_call(
        _drop_path_kernel,
        out_shape=jax.ShapeDtypeStruct((B, F), x.dtype),
        grid=grid,
        in_specs=[
            # Per-sample scales; block index constant across the inner (j) loop
            # so Pallas does not re-DMA it per step.
            pl.BlockSpec((tb, 1), lambda i, j: (i, 0)),
            pl.BlockSpec((tb, tf), lambda i, j: (i, j)),   # lane-dense x tile
        ],
        out_specs=pl.BlockSpec((tb, tf), lambda i, j: (i, j)),
        # Output may reuse x2's HBM buffer when the caller donates it.
        input_output_aliases={1: 0},
        compiler_params=pltpu.CompilerParams(
            # Both axes independent; megacore parts may shard them.
            dimension_semantics=("parallel", "parallel"),
            vmem_limit_bytes=vmem_limit,
        ),
    )(scale, x2)
    return out2.reshape(x.shape)


class DropPath:
    """JAX/Pallas mirror of the PyTorch DropPath module."""

    def __init__(self, drop_prob=None):
        self.drop_prob = drop_prob
        self.training = True  # mirrors nn.Module.training flag

    def __call__(self, x, key=None):
        return drop_path(x, self.drop_prob or 0.0, self.training, key=key)


# ----------------------------------------------------------------------------
# Demo / self-test
# ----------------------------------------------------------------------------
if __name__ == "__main__":
    key = jax.random.PRNGKey(0)
    kx, km = jax.random.split(key)

    B, N, D = 2, 8, 32
    x = jax.random.normal(kx, (B, N, D), dtype=jnp.float32)

    drop_prob = 0.25
    keep_prob = 1.0 - drop_prob
    module = DropPath(drop_prob=drop_prob)

    # training=True path (the kernel path)
    module.training = True
    y = module(x, km)
    jax.block_until_ready(y)

    # pure-JAX reference with identical randoms
    u = jax.random.uniform(km, (B, 1), dtype=jnp.float32)
    ref_mask = jnp.floor(keep_prob + u).reshape(B, 1, 1)
    ref = x / keep_prob * ref_mask
    assert jnp.allclose(y, ref, atol=1e-6, rtol=1e-6), "training-mode mismatch vs reference"

    # bf16 path: kernel multiplies in f32 and casts on store
    xb = x.astype(jnp.bfloat16)
    yb = module(xb, km)
    jax.block_until_ready(yb)
    refb = (xb.astype(jnp.float32) * (ref_mask / keep_prob)).astype(jnp.bfloat16)
    assert jnp.allclose(yb.astype(jnp.float32), refb.astype(jnp.float32),
                        atol=1e-2, rtol=1e-2), "bf16 training-mode mismatch vs reference"

    # eval path: identity (matches `if drop_prob == 0.0 or not training: return x`)
    module.training = False
    y_eval = module(x, km)
    jax.block_until_ready(y_eval)
    assert jnp.allclose(y_eval, x), "eval-mode must be identity"

    print("KERNEL_OK")
</pallas_src>

<mosaic_0001>
module attributes {stable_mosaic.version = 11 : i64} {
  func.func @_drop_path_kernel(%arg0: i32, %arg1: i32, %arg2: memref<2x1xf32, #tpu.memory_space<vmem>>, %arg3: memref<2x256xf32, #tpu.memory_space<vmem>>, %arg4: memref<2x256xf32, #tpu.memory_space<vmem>>) attributes {dimension_semantics = [#tpu.dimension_semantics<parallel>, #tpu.dimension_semantics<parallel>], iteration_bounds = array<i64: 1, 1>, scalar_prefetch = 0 : i64, scratch_operands = 0 : i64, tpu.core_type = #tpu.core_type<tc>, window_params = [{transform_indices = @transform_0, window_bounds = array<i64: 2, 1>}, {transform_indices = @transform_1, window_bounds = array<i64: 2, 256>}, {transform_indices = @transform_2, window_bounds = array<i64: 2, 256>}]} {
    %c0 = arith.constant 0 : index
    %c0_0 = arith.constant 0 : index
    %0 = vector.load %arg3[%c0, %c0_0] : memref<2x256xf32, #tpu.memory_space<vmem>>, vector<2x256xf32>
    %c0_1 = arith.constant 0 : index
    %c0_2 = arith.constant 0 : index
    %1 = vector.load %arg2[%c0_1, %c0_2] : memref<2x1xf32, #tpu.memory_space<vmem>>, vector<2x1xf32>
    %2 = vector.broadcast %1 : vector<2x1xf32> to vector<2x256xf32>
    %3 = arith.mulf %0, %2 : vector<2x256xf32>
    %c0_3 = arith.constant 0 : index
    %c0_4 = arith.constant 0 : index
    %4 = vector.load %arg4[%c0_3, %c0_4] : memref<2x256xf32, #tpu.memory_space<vmem>>, vector<2x256xf32>
    tpu.vector_store %arg4[%c0_3, %c0_4], %3 {strides = array<i32>} : memref<2x256xf32, #tpu.memory_space<vmem>>, vector<2x256xf32>,
    return
  }
  func.func @transform_0(%arg0: i32, %arg1: i32) -> (i32, i32) {
    %c0_i32 = arith.constant 0 : i32
    %c0_i32_0 = arith.constant 0 : i32
    return %arg0, %c0_i32 : i32, i32
  }
  func.func @transform_1(%arg0: i32, %arg1: i32) -> (i32, i32) {
    %c0_i32 = arith.constant 0 : i32
    return %arg0, %arg1 : i32, i32
  }
  func.func @transform_2(%arg0: i32, %arg1: i32) -> (i32, i32) {
    %c0_i32 = arith.constant 0 : i32
    return %arg0, %arg1 : i32, i32
  }
}

</mosaic_0001>

<llo_original>
// kernel: tpu_custom_call.1
$region0: #{tpu_custom_call.1}
  #allocation0 [shape = 'u32[]', space=smem, size = 0x4, offset = 0x4, fixed_abs, tag = 'smem constant byte address 0x4 - core index']
  #allocation1 [shape = 'u32[144,128]{1,0:T(1,128)}', space=vmem, size = 0x12000, scoped, tag = 'internal scratch']
  %s0 = inlined_call_operand.vmem [shape: f32[2,1], index: 0, kind: input, shape index: {}]
  %s1 = inlined_call_operand.hbm [shape: f32[2,256], index: 1, kind: input, shape index: {}, may-alias: {1,2}]
  %s2 = inlined_call_operand.hbm [shape: f32[2,256], index: 2, kind: output, shape index: {}, may-alias: {1,2}]
  %s3 = sld [smem:[#allocation0]]
  $region22: #{tpu_custom_call.1} parent=0
    _
  %s5 = ssub.s32 1, %s3
  %s6 = scalar_select 0, %s5, %s3
  $region1: #{tpu_custom_call.1} parent=0
    #allocation2 [shape = 'u8[2048]{0}', space=vmem, size = 0x800, scoped, tag = 'input window, operand 1, single buffered']
    #allocation3 [shape = 's32[1]{0}', space=sflag, size = 0x4, scoped, tag = 'scoped memory for tpu_custom_call.1']
    #allocation4 [shape = 's32[1]{0}', space=sflag, size = 0x4, scoped, tag = 'scoped memory for tpu_custom_call.1']
    #allocation5 [shape = 'u8[2048]{0}', space=vmem, size = 0x800, scoped, tag = 'output window, operand 0, single buffered']
    %7 = vsyncpa [#allocation3], 0
    %8 = vsyncpa [#allocation4], 0
    // Predicated region
    $region2: #{tpu_custom_call.1} parent=1 // pred_check
      _
    $region3: #{tpu_custom_call.1} parent=1 // pred_check_branch
      %10 = sbr.rel (0) target = $region5
    $region4: #{tpu_custom_call.1} parent=1 // pred_region
      _
    $region5: #{tpu_custom_call.1} parent=1 // pred_fallthru
      _
    // Predicated region
    $region6: #{tpu_custom_call.1} parent=1 // pred_check
      _
    $region7: #{tpu_custom_call.1} parent=1 // pred_check_branch
      %12 = sbr.rel (0) target = $region9
    $region8: #{tpu_custom_call.1} parent=1 // pred_region
      %s14 = ssub.s32 64, 64
      %15 = vsyncadd [#allocation3], %s14
      %s17 = sshll.u32 [#allocation2], 4
      %s18 = int_to_ptr.vmem [resolvable:$true] %s17
      %20 = dma.hbm_to_vmem [thread:$0]  %s1, 64, %s18, [#allocation3]
    $region9: #{tpu_custom_call.1} parent=1 // pred_fallthru
      _
    // Predicated region
    $region10: #{tpu_custom_call.1} parent=1 // pred_check
      _
    $region11: #{tpu_custom_call.1} parent=1 // pred_check_branch
      %22 = sbr.rel (0) target = $region13
    $region12: #{tpu_custom_call.1} parent=1 // pred_region
      %23 = dma.done [#allocation3], 64
    $region13: #{tpu_custom_call.1} parent=1 // pred_fallthru
      _
    %v24 = vld [vmem:[#allocation2] sm:$0xf]
    %v25 = vld [vmem:[%s0] sm:$0x3]
    %27 = vset.pattern.permute.xlu0 0
    %28 = vperm.xlu0 %27, %v25
    %v29 = vpop.permute.xlu0 %28
    %v31 = vunpack.c.l.s4 269488144
    %v32 = vunpack.c.0.s8 %v31
    %v33 = vlaneseq
    %v34 = vshrl.u32 %v33, 7
    %v35 = vsub.s32 %v32, %v34
    %v36 = vrot.slane %v29, %v35
    %v38 = vmul.f32 %v24, %v36
    %39 = vst [vmem:[#allocation5] sm:$0xf] %v38
    // Predicated region
    $region14: #{tpu_custom_call.1} parent=1 // pred_check
      _
    $region15: #{tpu_custom_call.1} parent=1 // pred_check_branch
      %41 = sbr.rel (0) target = $region17
    $region16: #{tpu_custom_call.1} parent=1 // pred_region
      %s43 = ssub.s32 64, 64
      %44 = vsyncadd [#allocation4], %s43
      %s46 = sshll.u32 [#allocation5], 4
      %s47 = int_to_ptr.vmem [resolvable:$true] %s46
      %49 = dma.vmem_to_hbm [thread:$0]  %s47, 64, %s2, [#allocation4]
    $region17: #{tpu_custom_call.1} parent=1 // pred_fallthru
      _
    // Predicated region
    $region18: #{tpu_custom_call.1} parent=1 // pred_check
      _
    $region19: #{tpu_custom_call.1} parent=1 // pred_check_branch
      %51 = sbr.rel (0) target = $region21
    $region20: #{tpu_custom_call.1} parent=1 // pred_region
      %52 = dma.done [#allocation4], 64
    $region21: #{tpu_custom_call.1} parent=1 // pred_fallthru
      _
    %53 = vsyncpa [#allocation3], 1
    %54 = vsyncpa [#allocation4], 1

</llo_original>
